<compile_context>
chip_gen: v5e
topology: v5e:2x2
jax: 0.10.0
libtpu: 0.0.40
codegen_flags: <defaults>
</compile_context>

<pallas_src>
import functools

import jax
import jax.numpy as jnp
from jax import lax
from jax.experimental import pallas as pl
from jax.experimental.pallas import tpu as pltpu

LN_EPS = 1e-5                      # nn.LayerNorm default
_INV_SQRT2 = 0.7071067811865476    # 1/sqrt(2)


def _resblock_kernel(x_ref, vec_ref, b1_ref, w1_ref, w2_ref, o_ref,
                     xn_mm_sc, acc_sc, *, matmul_dtype, approximate_gelu):
    k = pl.program_id(1)
    nk = pl.num_programs(1)

    # --- once per row tile: LayerNorm (f32), cache it in matmul dtype for the
    # MXU LHS, and fold residual (normed x) + b2 into the accumulator init ---
    @pl.when(k == 0)
    def _():
        x = x_ref[...].astype(jnp.float32)                       # (TM, C)
        mu = jnp.mean(x, axis=-1, keepdims=True)
        var = jnp.mean(jnp.square(x - mu), axis=-1, keepdims=True)
        xn = (x - mu) * lax.rsqrt(var + LN_EPS)
        xn = xn * vec_ref[0:1, :] + vec_ref[1:2, :]              # gamma, beta
        xn_mm_sc[...] = xn.astype(matmul_dtype)
        acc_sc[...] = xn + vec_ref[2:3, :]                       # residual + b2

    # --- per hidden-dim block: Linear1 chunk -> GELU -> Linear2 accumulate ---
    h = jnp.dot(xn_mm_sc[...], w1_ref[...], preferred_element_type=jnp.float32)
    h = h + b1_ref[...]
    if approximate_gelu:
        h = jax.nn.gelu(h, approximate=True)           # tanh -> EUP slot
    else:
        h = 0.5 * h * (1.0 + lax.erf(h * _INV_SQRT2))  # exact, matches nn.GELU()
    acc_sc[...] += jnp.dot(h.astype(matmul_dtype), w2_ref[...],
                           preferred_element_type=jnp.float32)

    # --- finalize: accumulator already holds xn + b2 + proj(xn); cast + store ---
    @pl.when(k == nk - 1)
    def _():
        o_ref[...] = acc_sc[...].astype(o_ref.dtype)


def _round_up(x, m):
    return ((x + m - 1) // m) * m


def _cdiv(a, b):
    return -(-a // b)


def _choose_hidden_tile(channels, hidden_tile):
    """Multiple-of-128 divisor of C close to hidden_tile, else the full C."""
    if channels % 128 != 0:
        return channels
    tk = min(_round_up(hidden_tile, 128), channels)
    while channels % tk != 0:
        tk -= 128
    return max(tk, 128)


def simple_res_block(x, params, *, tile_m=None, hidden_tile=None,
                     matmul_dtype=jnp.bfloat16, approximate_gelu=False):
    """x: (..., C). Returns same shape/dtype as x."""
    orig_shape = x.shape
    C = orig_shape[-1]
    x2 = x.reshape(-1, C)
    N = x2.shape[0]

    x_bytes = jnp.dtype(x.dtype).itemsize
    w_bytes = jnp.dtype(matmul_dtype).itemsize

    # --- VMEM budget (generation-aware: v7x = 64 MiB/TC, v5e/v6e = 128 MiB) ---
    try:
        vmem_cap = int(pltpu.get_tpu_info().vmem_capacity_bytes)
    except Exception:
        vmem_cap = 64 << 20            # conservative (v7x) fallback
    budget = (vmem_cap * 3) // 4       # headroom for compiler-internal scratch

    # Per-row VMEM: x + out double-buffered, xn (matmul dtype) + acc (f32) scratch.
    per_row = C * (2 * x_bytes + 2 * x_bytes + w_bytes + 4)
    vec_alloc = 2 * 2 * 8 * _round_up(C, 128) * 4   # (3,C) + (1,tk) blocks, dbl-buf

    # --- hidden-dim (K) tiling: keep W1/W2 grid-resident whenever they fit ---
    # Resident => tk == C, weight index maps constant over the grid, so the
    # weights are DMA'd exactly once (Pallas skips copies for unchanged blocks).
    # TODO(synk): pipeline_mode=pl.Buffered(1) on the weight specs would halve
    # their VMEM footprint once single-buffered specs are confirmed everywhere.
    resident_alloc = 2 * 2 * C * C * w_bytes         # W1 + W2, double-buffered
    if hidden_tile is not None:
        tk = _choose_hidden_tile(C, hidden_tile)
    elif resident_alloc + 128 * per_row + vec_alloc <= budget:
        tk = C
    else:
        tk = 128 if C % 128 == 0 else C
        if C % 128 == 0:
            cand = C
            while cand >= 128:
                if (C % cand == 0 and
                        2 * 2 * C * cand * w_bytes + 128 * per_row + vec_alloc <= budget):
                    tk = cand
                    break
                cand -= 128
    n_k = C // tk
    weight_alloc = 2 * 2 * C * tk * w_bytes

    # --- row tiling ---
    rows_r = _round_up(max(N, 1), 8)
    tm_budget = max(budget - weight_alloc - vec_alloc, 8 * per_row)
    tm_max = max(((tm_budget // per_row) // 8) * 8, 8)
    if tile_m is None:
        tile_m = 256 if tk == C else 512     # bigger tiles when weights stream
    tm = max(8, min(_round_up(tile_m, 8), tm_max, rows_r))
    if N < 8:
        tm = N                               # full-dim (ragged) single block
    elif tm >= N and rows_r >= 16:
        tm = _round_up(_cdiv(N, 2), 8)       # >= 2 row tiles: keep both v7x TCs busy
    n_row_tiles = _cdiv(N, tm)

    # --- VMEM limit: never exceed the physical per-core capacity ---
    vmem_est = (2 * tm * C * x_bytes         # x blocks, double-buffered
                + 2 * tm * C * x_bytes       # out blocks, double-buffered
                + weight_alloc               # W1 + W2 blocks
                + vec_alloc                  # gamma/beta/b2 + b1 blocks
                + tm * C * w_bytes           # xn scratch (matmul dtype)
                + tm * C * 4)                # f32 accumulator scratch
    vmem_limit = int(min(max(vmem_est * 5 // 4 + (1 << 20), 32 << 20),
                         vmem_cap - (4 << 20)))

    # --- parameter prep: bf16 weights for the MXU, packed f32 vectors ---
    vec = jnp.stack([params["gamma"], params["beta"], params["b2"]]
                    ).astype(jnp.float32)                     # (3, C)
    b1 = params["b1"].reshape(1, C).astype(jnp.float32)       # (1, C)
    w1 = params["w1"].astype(matmul_dtype)                    # (C, C), y = x @ W + b
    w2 = params["w2"].astype(matmul_dtype)

    weight_stream = (1 if n_k == 1 else n_row_tiles) * 2 * C * C * w_bytes
    cost = pl.CostEstimate(
        flops=4 * N * C * C,                  # two (N x C x C) matmuls
        transcendentals=N * C,                # erf / tanh in GELU
        bytes_accessed=2 * N * C * x_bytes + weight_stream + 5 * C * 4,
    )

    kernel = functools.partial(_resblock_kernel,
                               matmul_dtype=matmul_dtype,
                               approximate_gelu=approximate_gelu)

    out = pl.pallas_call(
        kernel,
        out_shape=jax.ShapeDtypeStruct((N, C), x.dtype),
        grid_spec=pltpu.PrefetchScalarGridSpec(
            num_scalar_prefetch=0,
            grid=(n_row_tiles, n_k),
            in_specs=[
                pl.BlockSpec((tm, C), lambda i, k: (i, 0)),    # x rows
                pl.BlockSpec((3, C), lambda i, k: (0, 0)),     # gamma / beta / b2
                pl.BlockSpec((1, tk), lambda i, k: (0, k)),    # b1 chunk
                pl.BlockSpec((C, tk), lambda i, k: (0, k)),    # W1 column block
                pl.BlockSpec((tk, C), lambda i, k: (k, 0)),    # W2 row block
            ],
            out_specs=pl.BlockSpec((tm, C), lambda i, k: (i, 0)),
            scratch_shapes=[
                pltpu.VMEM((tm, C), matmul_dtype),   # cached LayerNorm out (MXU LHS)
                pltpu.VMEM((tm, C), jnp.float32),    # f32 accumulator (init = xn + b2)
            ],
        ),
        compiler_params=pltpu.CompilerParams(
            dimension_semantics=("parallel", "arbitrary"),
            vmem_limit_bytes=vmem_limit,
        ),
        cost_estimate=cost,
    )(x2, vec, b1, w1, w2)

    return out.reshape(orig_shape)


def init_params(key, channels, dtype=jnp.float32):
    """Deterministic synthetic parameters (shapes match the PyTorch module)."""
    k1, k2, k3, k4 = jax.random.split(key, 4)
    scale = 1.0 / jnp.sqrt(channels)
    # Weights stored already transposed: y = x @ W + b, W: (in, out) = (C, C).
    return dict(
        gamma=jnp.ones((channels,), dtype),
        beta=jnp.zeros((channels,), dtype),
        w1=(jax.random.normal(k1, (channels, channels), dtype) * scale),
        b1=(jax.random.normal(k2, (channels,), dtype) * 0.01),
        w2=(jax.random.normal(k3, (channels, channels), dtype) * scale),
        b2=(jax.random.normal(k4, (channels,), dtype) * 0.01),
    )


def _reference(x, p):
    """Pure-JAX reference of SimpleResBlock.forward (f32, erf GELU)."""
    mu = jnp.mean(x, axis=-1, keepdims=True)
    var = jnp.mean(jnp.square(x - mu), axis=-1, keepdims=True)
    xn = (x - mu) / jnp.sqrt(var + LN_EPS) * p["gamma"] + p["beta"]
    h = xn @ p["w1"] + p["b1"]
    h = 0.5 * h * (1.0 + lax.erf(h * _INV_SQRT2))
    y = h @ p["w2"] + p["b2"]
    return xn + y


if __name__ == "__main__":
    key = jax.random.PRNGKey(0)
    kx1, kx2, kp = jax.random.split(key, 3)
    C = 256  # lane-dense channel width (multiple of 128)
    params = init_params(kp, C)

    # 1) Exact-parity path: f32 matmuls, forced hidden-dim blocking (nk=2),
    #    small row tiles and an odd row count (14) -> ragged last row tile.
    x1 = jax.random.normal(kx1, (2, 7, C), jnp.float32)
    out1 = simple_res_block(x1, params, tile_m=8, hidden_tile=128,
                            matmul_dtype=jnp.float32)
    out1 = jax.block_until_ready(out1)
    ref1 = _reference(x1.reshape(-1, C), params).reshape(x1.shape)
    assert out1.shape == x1.shape and out1.dtype == x1.dtype
    assert jnp.allclose(out1, ref1, atol=5e-4, rtol=5e-4)

    # 2) Performance path: auto tiling (resident weights, bf16 matmuls,
    #    f32 accumulation, >= 2 row tiles for megacore).
    x2 = jax.random.normal(kx2, (4, 16, C), jnp.float32)
    out2 = simple_res_block(x2, params)
    out2 = jax.block_until_ready(out2)
    ref2 = _reference(x2.reshape(-1, C), params).reshape(x2.shape)
    assert out2.shape == x2.shape and out2.dtype == x2.dtype
    assert jnp.allclose(out2, ref2, atol=5e-2, rtol=5e-2)

    print("KERNEL_OK")
</pallas_src>

<mosaic_0001>
module attributes {stable_mosaic.version = 11 : i64} {
  func.func @_resblock_kernel(%arg0: i32, %arg1: i32, %arg2: memref<8x256xf32, #tpu.memory_space<vmem>>, %arg3: memref<3x256xf32, #tpu.memory_space<vmem>>, %arg4: memref<1x128xf32, #tpu.memory_space<vmem>>, %arg5: memref<256x128xf32, #tpu.memory_space<vmem>>, %arg6: memref<128x256xf32, #tpu.memory_space<vmem>>, %arg7: memref<8x256xf32, #tpu.memory_space<vmem>>, %arg8: memref<8x256xf32, #tpu.memory_space<vmem>>, %arg9: memref<8x256xf32, #tpu.memory_space<vmem>>) attributes {dimension_semantics = [#tpu.dimension_semantics<parallel>, #tpu.dimension_semantics<arbitrary>], iteration_bounds = array<i64: 2, 2>, scalar_prefetch = 0 : i64, scratch_operands = 2 : i64, tpu.core_type = #tpu.core_type<tc>, window_params = [{transform_indices = @transform_0, window_bounds = array<i64: 8, 256>}, {pipeline_mode = #tpu.pipeline_mode<synchronous>, transform_indices = @transform_1, window_bounds = array<i64: 3, 256>}, {transform_indices = @transform_2, window_bounds = array<i64: 1, 128>}, {transform_indices = @transform_3, window_bounds = array<i64: 256, 128>}, {transform_indices = @transform_4, window_bounds = array<i64: 128, 256>}, {transform_indices = @transform_5, window_bounds = array<i64: 8, 256>}]} {
    %c0_i32 = arith.constant 0 : i32
    %0 = arith.cmpi eq, %arg1, %c0_i32 : i32
    %1 = arith.extui %0 : i1 to i32
    %c0_i32_0 = arith.constant 0 : i32
    %2 = arith.cmpi ne, %1, %c0_i32_0 : i32
    scf.if %2 {
      %c0_17 = arith.constant 0 : index
      %c0_18 = arith.constant 0 : index
      %25 = vector.load %arg2[%c0_17, %c0_18] : memref<8x256xf32, #tpu.memory_space<vmem>>, vector<8x256xf32>
      %cst_19 = arith.constant dense<0.000000e+00> : vector<8xf32>
      %26 = vector.multi_reduction <add>, %25, %cst_19 [1] : vector<8x256xf32> to vector<8xf32>
      %27 = vector.shape_cast %26 : vector<8xf32> to vector<8x1xf32>
      %cst_20 = arith.constant 2.560000e+02 : f32
      %28 = vector.broadcast %cst_20 : f32 to vector<8x1xf32>
      %29 = arith.divf %27, %28 : vector<8x1xf32>
      %30 = vector.broadcast %29 : vector<8x1xf32> to vector<8x256xf32>
      %31 = arith.subf %25, %30 : vector<8x256xf32>
      %32 = arith.mulf %31, %31 : vector<8x256xf32>
      %cst_21 = arith.constant dense<0.000000e+00> : vector<8xf32>
      %33 = vector.multi_reduction <add>, %32, %cst_21 [1] : vector<8x256xf32> to vector<8xf32>
      %34 = vector.shape_cast %33 : vector<8xf32> to vector<8x1xf32>
      %cst_22 = arith.constant 2.560000e+02 : f32
      %35 = vector.broadcast %cst_22 : f32 to vector<8x1xf32>
      %36 = arith.divf %34, %35 : vector<8x1xf32>
      %37 = vector.broadcast %29 : vector<8x1xf32> to vector<8x256xf32>
      %38 = arith.subf %25, %37 : vector<8x256xf32>
      %cst_23 = arith.constant 9.99999974E-6 : f32
      %39 = vector.broadcast %cst_23 : f32 to vector<8x1xf32>
      %40 = arith.addf %36, %39 : vector<8x1xf32>
      %41 = math.rsqrt %40 : vector<8x1xf32>
      %42 = vector.broadcast %41 : vector<8x1xf32> to vector<8x256xf32>
      %43 = arith.mulf %38, %42 : vector<8x256xf32>
      %c0_24 = arith.constant 0 : index
      %c0_25 = arith.constant 0 : index
      %44 = vector.load %arg3[%c0_24, %c0_25] : memref<3x256xf32, #tpu.memory_space<vmem>>, vector<1x256xf32>
      %45 = vector.broadcast %44 : vector<1x256xf32> to vector<8x256xf32>
      %46 = arith.mulf %43, %45 : vector<8x256xf32>
      %c1 = arith.constant 1 : index
      %c0_26 = arith.constant 0 : index
      %47 = vector.load %arg3[%c1, %c0_26] : memref<3x256xf32, #tpu.memory_space<vmem>>, vector<1x256xf32>
      %48 = vector.broadcast %47 : vector<1x256xf32> to vector<8x256xf32>
      %49 = arith.addf %46, %48 : vector<8x256xf32>
      %c0_27 = arith.constant 0 : index
      %c0_28 = arith.constant 0 : index
      %50 = vector.load %arg8[%c0_27, %c0_28] : memref<8x256xf32, #tpu.memory_space<vmem>>, vector<8x256xf32>
      tpu.vector_store %arg8[%c0_27, %c0_28], %49 {strides = array<i32>} : memref<8x256xf32, #tpu.memory_space<vmem>>, vector<8x256xf32>,
      %c2 = arith.constant 2 : index
      %c0_29 = arith.constant 0 : index
      %51 = vector.load %arg3[%c2, %c0_29] : memref<3x256xf32, #tpu.memory_space<vmem>>, vector<1x256xf32>
      %52 = vector.broadcast %51 : vector<1x256xf32> to vector<8x256xf32>
      %53 = arith.addf %49, %52 : vector<8x256xf32>
      %c0_30 = arith.constant 0 : index
      %c0_31 = arith.constant 0 : index
      %54 = vector.load %arg9[%c0_30, %c0_31] : memref<8x256xf32, #tpu.memory_space<vmem>>, vector<8x256xf32>
      tpu.vector_store %arg9[%c0_30, %c0_31], %53 {strides = array<i32>} : memref<8x256xf32, #tpu.memory_space<vmem>>, vector<8x256xf32>,
    } else {
    }
    %c0 = arith.constant 0 : index
    %c0_1 = arith.constant 0 : index
    %3 = vector.load %arg8[%c0, %c0_1] : memref<8x256xf32, #tpu.memory_space<vmem>>, vector<8x256xf32>
    %c0_2 = arith.constant 0 : index
    %c0_3 = arith.constant 0 : index
    %4 = vector.load %arg5[%c0_2, %c0_3] : memref<256x128xf32, #tpu.memory_space<vmem>>, vector<256x128xf32>
    %cst = arith.constant dense<0.000000e+00> : vector<8x128xf32>
    %5 = tpu.matmul %3, %4, %cst {dimension_numbers = #tpu.dot_dimension_numbers<[1], [0], [0], [1], [0, 0, 1, 1], [], []>} : vector<8x256xf32>, vector<256x128xf32>, vector<8x128xf32> -> vector<8x128xf32>
    %c0_4 = arith.constant 0 : index
    %c0_5 = arith.constant 0 : index
    %6 = vector.load %arg4[%c0_4, %c0_5] : memref<1x128xf32, #tpu.memory_space<vmem>>, vector<1x128xf32>
    %7 = vector.broadcast %6 : vector<1x128xf32> to vector<8x128xf32>
    %8 = arith.addf %5, %7 : vector<8x128xf32>
    %cst_6 = arith.constant 5.000000e-01 : f32
    %9 = vector.broadcast %cst_6 : f32 to vector<8x128xf32>
    %10 = arith.mulf %9, %8 : vector<8x128xf32>
    %cst_7 = arith.constant 0.707106769 : f32
    %11 = vector.broadcast %cst_7 : f32 to vector<8x128xf32>
    %12 = arith.mulf %8, %11 : vector<8x128xf32>
    %13 = math.erf %12 : vector<8x128xf32>
    %cst_8 = arith.constant 1.000000e+00 : f32
    %14 = vector.broadcast %cst_8 : f32 to vector<8x128xf32>
    %15 = arith.addf %14, %13 : vector<8x128xf32>
    %16 = arith.mulf %10, %15 : vector<8x128xf32>
    %c0_9 = arith.constant 0 : index
    %c0_10 = arith.constant 0 : index
    %17 = vector.load %arg9[%c0_9, %c0_10] : memref<8x256xf32, #tpu.memory_space<vmem>>, vector<8x256xf32>
    %c0_11 = arith.constant 0 : index
    %c0_12 = arith.constant 0 : index
    %18 = vector.load %arg6[%c0_11, %c0_12] : memref<128x256xf32, #tpu.memory_space<vmem>>, vector<128x256xf32>
    %cst_13 = arith.constant dense<0.000000e+00> : vector<8x256xf32>
    %19 = tpu.matmul %16, %18, %cst_13 {dimension_numbers = #tpu.dot_dimension_numbers<[1], [0], [0], [1], [0, 0, 1, 1], [], []>} : vector<8x128xf32>, vector<128x256xf32>, vector<8x256xf32> -> vector<8x256xf32>
    %20 = arith.addf %17, %19 : vector<8x256xf32>
    %c0_14 = arith.constant 0 : index
    %c0_15 = arith.constant 0 : index
    %21 = vector.load %arg9[%c0_14, %c0_15] : memref<8x256xf32, #tpu.memory_space<vmem>>, vector<8x256xf32>
    tpu.vector_store %arg9[%c0_14, %c0_15], %20 {strides = array<i32>} : memref<8x256xf32, #tpu.memory_space<vmem>>, vector<8x256xf32>,
    %c1_i32 = arith.constant 1 : i32
    %22 = arith.cmpi eq, %arg1, %c1_i32 : i32
    %23 = arith.extui %22 : i1 to i32
    %c0_i32_16 = arith.constant 0 : i32
    %24 = arith.cmpi ne, %23, %c0_i32_16 : i32
    scf.if %24 {
      %c0_17 = arith.constant 0 : index
      %c0_18 = arith.constant 0 : index
      %25 = vector.load %arg9[%c0_17, %c0_18] : memref<8x256xf32, #tpu.memory_space<vmem>>, vector<8x256xf32>
      %c0_19 = arith.constant 0 : index
      %c0_20 = arith.constant 0 : index
      %26 = vector.load %arg7[%c0_19, %c0_20] : memref<8x256xf32, #tpu.memory_space<vmem>>, vector<8x256xf32>
      tpu.vector_store %arg7[%c0_19, %c0_20], %25 {strides = array<i32>} : memref<8x256xf32, #tpu.memory_space<vmem>>, vector<8x256xf32>,
    } else {
    }
    return
  }
  func.func @transform_0(%arg0: i32, %arg1: i32) -> (i32, i32) {
    %c0_i32 = arith.constant 0 : i32
    %c0_i32_0 = arith.constant 0 : i32
    return %arg0, %c0_i32 : i32, i32
  }
  func.func @transform_1(%arg0: i32, %arg1: i32) -> (i32, i32) {
    %c0_i32 = arith.constant 0 : i32
    %c0_i32_0 = arith.constant 0 : i32
    %c0_i32_1 = arith.constant 0 : i32
    return %c0_i32, %c0_i32_0 : i32, i32
  }
  func.func @transform_2(%arg0: i32, %arg1: i32) -> (i32, i32) {
    %c0_i32 = arith.constant 0 : i32
    %c0_i32_0 = arith.constant 0 : i32
    return %c0_i32, %arg1 : i32, i32
  }
  func.func @transform_3(%arg0: i32, %arg1: i32) -> (i32, i32) {
    %c0_i32 = arith.constant 0 : i32
    %c0_i32_0 = arith.constant 0 : i32
    return %c0_i32, %arg1 : i32, i32
  }
  func.func @transform_4(%arg0: i32, %arg1: i32) -> (i32, i32) {
    %c0_i32 = arith.constant 0 : i32
    %c0_i32_0 = arith.constant 0 : i32
    return %arg1, %c0_i32 : i32, i32
  }
  func.func @transform_5(%arg0: i32, %arg1: i32) -> (i32, i32) {
    %c0_i32 = arith.constant 0 : i32
    %c0_i32_0 = arith.constant 0 : i32
    return %arg0, %c0_i32 : i32, i32
  }
}

</mosaic_0001>

<llo_original>
// kernel: tpu_custom_call.1
$region0: #{tpu_custom_call.1}
  #allocation0 [shape = 'u32[]', space=smem, size = 0x4, offset = 0x4, fixed_abs, tag = 'smem constant byte address 0x4 - core index']
  #allocation1 [shape = 'u32[72,128]{1,0:T(1,128)}', space=vmem, size = 0x9000, scoped, tag = 'internal scratch']
  #allocation2 [shape = 'f32[8,256]{1,0:T(8,128)}', space=vmem, size = 0x2000, scoped, tag = 'scratch operand']
  #allocation3 [shape = 'f32[8,256]{1,0:T(8,128)}', space=vmem, size = 0x2000, scoped, tag = 'scratch operand']
  %s0 = inlined_call_operand.hbm [shape: f32[14,256], index: 0, kind: input, shape index: {}]
  %s1 = inlined_call_operand.hbm [shape: f32[3,256], index: 1, kind: input, shape index: {}]
  %s2 = inlined_call_operand.hbm [shape: f32[1,256], index: 2, kind: input, shape index: {}]
  %s3 = inlined_call_operand.hbm [shape: f32[256,256], index: 3, kind: input, shape index: {}]
  %s4 = inlined_call_operand.hbm [shape: f32[256,256], index: 4, kind: input, shape index: {}]
  %s5 = inlined_call_operand.hbm [shape: f32[14,256], index: 5, kind: output, shape index: {}]
  %s6 = sld [smem:[#allocation0]]
  $region81: #{tpu_custom_call.1} parent=0
    _
  %s8 = ssub.s32 1, %s6
  %s9 = scalar_select 0, %s8, %s6
  $region1: #{tpu_custom_call.1} parent=0
    #allocation4 [shape = 'u8[16384]{0}', space=vmem, size = 0x4000, scoped, tag = 'input window, operand 0']
    #allocation5 [shape = 's32[2]{0}', space=sflag, size = 0x8, scoped, tag = 'scoped memory for tpu_custom_call.1']
    #allocation6 [shape = 's32[2]{0}', space=sflag, size = 0x8, scoped, tag = 'scoped memory for tpu_custom_call.1']
    #allocation7 [shape = 'u8[4096]{0}', space=vmem, size = 0x1000, scoped, tag = 'input window, operand 1, single buffered']
    #allocation8 [shape = 's32[1]{0}', space=sflag, size = 0x4, scoped, tag = 'scoped memory for tpu_custom_call.1']
    #allocation9 [shape = 'u8[1024]{0}', space=vmem, size = 0x400, scoped, tag = 'input window, operand 2']
    #allocation10 [shape = 'u8[262144]{0}', space=vmem, size = 0x40000, scoped, tag = 'input window, operand 3']
    #allocation11 [shape = 'u8[262144]{0}', space=vmem, size = 0x40000, scoped, tag = 'input window, operand 4']
    #allocation12 [shape = 'u8[16384]{0}', space=vmem, size = 0x4000, scoped, tag = 'output window, operand 0']
    %10 = vsyncpa [#allocation5], 0
    %s11 = scalar_lea.sflag [#allocation5], 1
    %12 = vsyncpa %s11, 0
    %13 = vsyncpa [#allocation8], 0
    %14 = vsyncpa [#allocation6], 0
    %s15 = scalar_lea.sflag [#allocation6], 1
    %16 = vsyncpa %s15, 0
    loop: start=0, step=1, limit=6
    $region2: #{tpu_custom_call.1} parent=1 // loop_pre_header
      _
    $region3: #{tpu_custom_call.1} parent=1 // loop_header
      %s18 = sphi 0, %s22
      %p19 = scmp.ge.s32.totalorder %s18, 6
      %s25 = sphi 0, %s37
      %s26 = sphi 0, %s33
      %s27 = sphi 0, %s25
      %s28 = sphi 0, %s26
      %s29 = sphi 0, %s27
      %s30 = sphi 0, %s28
      %s40 = sphi 0, %s42
      %s43 = sphi 0, %s40
      %s44 = sphi 0, %s43
      %s60 = sphi 0, %s44
      %s64 = sphi 0, %s64
      %s66 = sphi 0, %s64
      %s67 = sphi 0, %s66
      %s81 = sphi 0, %s67
      %s87 = sphi 0, %s89
      %s90 = sphi 0, %s87
      %s91 = sphi 0, %s90
      %s107 = sphi 0, %s91
      %s113 = sphi 0, %s115
      %s116 = sphi 0, %s113
      %s117 = sphi 0, %s116
      %s133 = sphi 0, %s117
      %s139 = sphi 0, %s141
      %s142 = sphi 0, %s139
      %s143 = sphi 0, %s142
      %s159 = sphi 0, %s143
      %s165 = sphi 0, %s167
      %s168 = sphi 0, %s165
      %s169 = sphi 0, %s168
      %s185 = sphi 0, %s169
    $region4: #{tpu_custom_call.1} parent=1 // loop_header_branch
      %21 = sbr.rel (%p19) target = $region8
    $region5: #{tpu_custom_call.1} parent=1 // loop_body
      %s23 = ssub.s32 %s18, 1
      %s24 = ssub.s32 %s18, 2
      %s31 = sadd.s32 1, %s26
      %p32 = scmp.ge.s32.totalorder %s31, 2
      %s33 = scalar_select %p32, 0, %s31
      %s34 = sadd.s32 1, %s25
      %s35 = scalar_select %p32, %s34, %s25
      %p36 = scmp.ge.s32.totalorder %s35, 2
      %s37 = scalar_select %p36, 0, %s35
      %s38 = ssub.s32 %s25, %s37
      %p39 = scmp.eq.s32.totalorder %s38, 0
      %s41 = sadd.s32 %s40, 1
      %s42 = scalar_select %p39, %s40, %s41
      %p45 = pneg %p39
      %p46 = scmp.eq.s32.totalorder %s18, 3
      %p47 = por %p45, %p46
      %p48 = scmp.ne.s32.totalorder %s40, %s43
      %p49 = scmp.eq.s32.totalorder %s18, 0
      %p50 = por %p48, %p49
      %p51 = scmp.ne.s32.totalorder %s40, %s43
      %p52 = scmp.eq.s32.totalorder %s23, 3
      %p53 = por %p51, %p52
      %p54 = scmp.ne.s32.totalorder %s43, %s44
      %p55 = scmp.eq.s32.totalorder %s23, 0
      %p56 = por %p54, %p55
      %p57 = scmp.ne.s32.totalorder %s43, %s44
      %p58 = scmp.eq.s32.totalorder %s24, 3
      %p59 = por %p57, %p58
      %p61 = scmp.ne.s32.totalorder %s44, %s60
      %p62 = scmp.eq.s32.totalorder %s24, 0
      %p63 = por %p61, %p62
      %s65 = sadd.s32 %s64, 1
      %p68 = scmp.eq.s32.totalorder %s18, 3
      %p69 = scmp.ne.s32.totalorder %s64, %s66
      %p70 = scmp.eq.s32.totalorder %s18, 0
      %p71 = por %p69, %p70
      %p72 = scmp.ne.s32.totalorder %s64, %s66
      %p73 = scmp.eq.s32.totalorder %s23, 3
      %p74 = por %p72, %p73
      %p75 = scmp.ne.s32.totalorder %s66, %s67
      %p76 = scmp.eq.s32.totalorder %s23, 0
      %p77 = por %p75, %p76
      %p78 = scmp.ne.s32.totalorder %s66, %s67
      %p79 = scmp.eq.s32.totalorder %s24, 3
      %p80 = por %p78, %p79
      %p82 = scmp.ne.s32.totalorder %s67, %s81
      %p83 = scmp.eq.s32.totalorder %s24, 0
      %p84 = por %p82, %p83
      %s85 = ssub.s32 %s26, %s33
      %p86 = scmp.eq.s32.totalorder %s85, 0
      %s88 = sadd.s32 %s87, 1
      %s89 = scalar_select %p86, %s87, %s88
      %p92 = pneg %p86
      %p93 = scmp.eq.s32.totalorder %s18, 3
      %p94 = por %p92, %p93
      %p95 = scmp.ne.s32.totalorder %s87, %s90
      %p96 = scmp.eq.s32.totalorder %s18, 0
      %p97 = por %p95, %p96
      %p98 = scmp.ne.s32.totalorder %s87, %s90
      %p99 = scmp.eq.s32.totalorder %s23, 3
      %p100 = por %p98, %p99
      %p101 = scmp.ne.s32.totalorder %s90, %s91
      %p102 = scmp.eq.s32.totalorder %s23, 0
      %p103 = por %p101, %p102
      %p104 = scmp.ne.s32.totalorder %s90, %s91
      %p105 = scmp.eq.s32.totalorder %s24, 3
      %p106 = por %p104, %p105
      %p108 = scmp.ne.s32.totalorder %s91, %s107
      %p109 = scmp.eq.s32.totalorder %s24, 0
      %p110 = por %p108, %p109
      %s111 = ssub.s32 %s26, %s33
      %p112 = scmp.eq.s32.totalorder %s111, 0
      %s114 = sadd.s32 %s113, 1
      %s115 = scalar_select %p112, %s113, %s114
      %p118 = pneg %p112
      %p119 = scmp.eq.s32.totalorder %s18, 3
      %p120 = por %p118, %p119
      %p121 = scmp.ne.s32.totalorder %s113, %s116
      %p122 = scmp.eq.s32.totalorder %s18, 0
      %p123 = por %p121, %p122
      %p124 = scmp.ne.s32.totalorder %s113, %s116
      %p125 = scmp.eq.s32.totalorder %s23, 3
      %p126 = por %p124, %p125
      %p127 = scmp.ne.s32.totalorder %s116, %s117
      %p128 = scmp.eq.s32.totalorder %s23, 0
      %p129 = por %p127, %p128
      %p130 = scmp.ne.s32.totalorder %s116, %s117
      %p131 = scmp.eq.s32.totalorder %s24, 3
      %p132 = por %p130, %p131
      %p134 = scmp.ne.s32.totalorder %s117, %s133
      %p135 = scmp.eq.s32.totalorder %s24, 0
      %p136 = por %p134, %p135
      %s137 = ssub.s32 %s26, %s33
      %p138 = scmp.eq.s32.totalorder %s137, 0
      %s140 = sadd.s32 %s139, 1
      %s141 = scalar_select %p138, %s139, %s140
      %p144 = pneg %p138
      %p145 = scmp.eq.s32.totalorder %s18, 3
      %p146 = por %p144, %p145
      %p147 = scmp.ne.s32.totalorder %s139, %s142
      %p148 = scmp.eq.s32.totalorder %s18, 0
      %p149 = por %p147, %p148
      %p150 = scmp.ne.s32.totalorder %s139, %s142
      %p151 = scmp.eq.s32.totalorder %s23, 3
      %p152 = por %p150, %p151
      %p153 = scmp.ne.s32.totalorder %s142, %s143
      %p154 = scmp.eq.s32.totalorder %s23, 0
      %p155 = por %p153, %p154
      %p156 = scmp.ne.s32.totalorder %s142, %s143
      %p157 = scmp.eq.s32.totalorder %s24, 3
      %p158 = por %p156, %p157
      %p160 = scmp.ne.s32.totalorder %s143, %s159
      %p161 = scmp.eq.s32.totalorder %s24, 0
      %p162 = por %p160, %p161
      %s163 = ssub.s32 %s25, %s37
      %p164 = scmp.eq.s32.totalorder %s163, 0
      %s166 = sadd.s32 %s165, 1
      %s167 = scalar_select %p164, %s165, %s166
      %p170 = pneg %p164
      %p171 = scmp.eq.s32.totalorder %s18, 3
      %p172 = por %p170, %p171
      %p173 = scmp.ne.s32.totalorder %s165, %s168
      %p174 = scmp.eq.s32.totalorder %s18, 0
      %p175 = por %p173, %p174
      %p176 = scmp.ne.s32.totalorder %s165, %s168
      %p177 = scmp.eq.s32.totalorder %s23, 3
      %p178 = por %p176, %p177
      %p179 = scmp.ne.s32.totalorder %s168, %s169
      %p180 = scmp.eq.s32.totalorder %s23, 0
      %p181 = por %p179, %p180
      %p182 = scmp.ne.s32.totalorder %s168, %s169
      %p183 = scmp.eq.s32.totalorder %s24, 3
      %p184 = por %p182, %p183
      %p186 = scmp.ne.s32.totalorder %s169, %s185
      %p187 = scmp.eq.s32.totalorder %s24, 0
      %p188 = por %p186, %p187
      %p189 = scmp.le.s32.totalorder 1, %s18
      %p190 = scmp.lt.s32.totalorder %s18, 5
      %p191 = pnand %p189, %p190
      %p192 = pneg %p191
      // Predicated region
      $region9: #{tpu_custom_call.1} parent=5 // pred_check
        _
      $region10: #{tpu_custom_call.1} parent=5 // pred_check_branch
        %194 = sbr.rel (%p191) target = $region12
      $region11: #{tpu_custom_call.1} parent=5 // pred_region
        %s195 = ssub.s32 %s18, 1
        // Predicated region
        $region13: #{tpu_custom_call.1} parent=11 // pred_check
          %p196 = pneg %p77
        $region14: #{tpu_custom_call.1} parent=11 // pred_check_branch
          %198 = sbr.rel (%p196) target = $region16
        $region15: #{tpu_custom_call.1} parent=11 // pred_region
          %200 = vsyncadd [#allocation8], 0
          %s202 = sshll.u32 %s1, 4
          %s203 = int_to_ptr.hbm [resolvable:$true] %s202
          %s204 = sshll.u32 [#allocation7], 4
          %s205 = int_to_ptr.vmem [resolvable:$true] %s204
          %207 = dma.hbm_to_vmem [thread:$0]  %s203, 128, %s205, [#allocation8]
        $region16: #{tpu_custom_call.1} parent=11 // pred_fallthru
          _
      $region12: #{tpu_custom_call.1} parent=5 // pred_fallthru
        _
      %p208 = scmp.lt.s32.totalorder %s18, 4
      // Predicated region
      $region17: #{tpu_custom_call.1} parent=5 // pred_check
        %p209 = pneg %p208
      $region18: #{tpu_custom_call.1} parent=5 // pred_check_branch
        %211 = sbr.rel (%p209) target = $region20
      $region19: #{tpu_custom_call.1} parent=5 // pred_region
        // Predicated region
        $region21: #{tpu_custom_call.1} parent=19 // pred_check
          %p212 = pneg %p50
        $region22: #{tpu_custom_call.1} parent=19 // pred_check_branch
          %214 = sbr.rel (%p212) target = $region24
        $region23: #{tpu_custom_call.1} parent=19 // pred_region
          %s215 = sand.u32 %s18, 1
          %s216 = scalar_lea.sflag [#allocation5], %s215
          %s217 = sand.u32 %s40, 1
          %s218 = smul.addr %s217, 16
          %s219 = scalar_lea.vmem [#allocation4], %s218
          %221 = vsyncadd %s216, 0
          %s222 = smul.addr %s25, 2
          %s223 = smul.addr %s222, 8
          %s224 = scalar_lea.hbm %s0, %s223
          %s226 = sshll.u32 %s224, 4
          %s227 = int_to_ptr.hbm [resolvable:$true] %s226
          %s228 = sshll.u32 %s219, 4
          %s229 = int_to_ptr.vmem [resolvable:$true] %s228
          %231 = dma.hbm_to_vmem [thread:$0]  %s227, 256, %s229, %s216
        $region24: #{tpu_custom_call.1} parent=19 // pred_fallthru
          _
        // Predicated region
        $region25: #{tpu_custom_call.1} parent=19 // pred_check
          %p232 = pneg %p97
        $region26: #{tpu_custom_call.1} parent=19 // pred_check_branch
          %234 = sbr.rel (%p232) target = $region28
        $region27: #{tpu_custom_call.1} parent=19 // pred_region
          %s235 = sand.u32 %s18, 1
          %s236 = scalar_lea.sflag [#allocation5], %s235
          %s237 = sand.u32 %s87, 1
          %s238 = scalar_lea.vmem [#allocation9], %s237
          %240 = vsyncadd %s236, 0
          %s241 = scalar_lea.hbm %s2, %s26
          %s243 = sshll.u32 %s241, 4
          %s244 = int_to_ptr.hbm [resolvable:$true] %s243
          %s245 = sshll.u32 %s238, 4
          %s246 = int_to_ptr.vmem [resolvable:$true] %s245
          %248 = dma.hbm_to_vmem [thread:$0]  %s244, 16, %s246, %s236
        $region28: #{tpu_custom_call.1} parent=19 // pred_fallthru
          _
        // Predicated region
        $region29: #{tpu_custom_call.1} parent=19 // pred_check
          %p249 = pneg %p123
        $region30: #{tpu_custom_call.1} parent=19 // pred_check_branch
          %251 = sbr.rel (%p249) target = $region32
        $region31: #{tpu_custom_call.1} parent=19 // pred_region
          %s252 = sand.u32 %s18, 1
          %s253 = scalar_lea.sflag [#allocation5], %s252
          %s254 = sand.u32 %s113, 1
          %s255 = smul.addr %s254, 256
          %s256 = scalar_lea.vmem [#allocation10], %s255
          %258 = vsyncadd %s253, 0
          %s259 = smul.addr %s26, 8
          %s260 = scalar_lea.hbm %s3, %s259
          %s261 = sshll.u32 %s260, 4
          %s262 = int_to_ptr.hbm [resolvable:$true] %s261
          %s263 = sshll.u32 %s256, 4
          %s264 = int_to_ptr.vmem [resolvable:$true] %s263
          %269 = dma.hbm_to_vmem [thread:$0]  %s262, 4096, %s264, %s253, 256, 128, 8
        $region32: #{tpu_custom_call.1} parent=19 // pred_fallthru
          _
        // Predicated region
        $region33: #{tpu_custom_call.1} parent=19 // pred_check
          %p270 = pneg %p149
        $region34: #{tpu_custom_call.1} parent=19 // pred_check_branch
          %272 = sbr.rel (%p270) target = $region36
        $region35: #{tpu_custom_call.1} parent=19 // pred_region
          %s273 = sand.u32 %s18, 1
          %s274 = scalar_lea.sflag [#allocation5], %s273
          %s275 = sand.u32 %s139, 1
          %s276 = smul.addr %s275, 256
          %s277 = scalar_lea.vmem [#allocation11], %s276
          %s278 = smul.u32 16, %s26
          %280 = vsyncadd %s274, 0
          %s281 = smul.addr %s278, 2
          %s282 = smul.addr %s281, 8
          %s283 = scalar_lea.hbm %s4, %s282
          %s284 = sshll.u32 %s283, 4
          %s285 = int_to_ptr.hbm [resolvable:$true] %s284
          %s286 = sshll.u32 %s277, 4
          %s287 = int_to_ptr.vmem [resolvable:$true] %s286
          %292 = dma.hbm_to_vmem [thread:$0]  %s285, 4096, %s287, %s274, 256, 256, 16
        $region36: #{tpu_custom_call.1} parent=19 // pred_fallthru
          _
      $region20: #{tpu_custom_call.1} parent=5 // pred_fallthru
        _
      %p293 = scmp.le.s32.totalorder 1, %s18
      %p294 = scmp.lt.s32.totalorder %s18, 5
      %p295 = pnand %p293, %p294
      %p296 = pneg %p295
      // Predicated region
      $region37: #{tpu_custom_call.1} parent=5 // pred_check
        _
      $region38: #{tpu_custom_call.1} parent=5 // pred_check_branch
        %298 = sbr.rel (%p295) target = $region40
      $region39: #{tpu_custom_call.1} parent=5 // pred_region
        %s299 = ssub.s32 %s18, 1
        %s300 = sand.u32 %s23, 1
        %s301 = scalar_lea.sflag [#allocation5], %s300
        %s302 = sand.u32 %s43, 1
        %s303 = smul.addr %s302, 16
        %s304 = scalar_lea.vmem [#allocation4], %s303
        // Predicated region
        $region41: #{tpu_custom_call.1} parent=39 // pred_check
          %p305 = pneg %p56
        $region42: #{tpu_custom_call.1} parent=39 // pred_check_branch
          %307 = sbr.rel (%p305) target = $region44
        $region43: #{tpu_custom_call.1} parent=39 // pred_region
          %309 = dma.done %s301, 256
        $region44: #{tpu_custom_call.1} parent=39 // pred_fallthru
          _
        // Predicated region
        $region45: #{tpu_custom_call.1} parent=39 // pred_check
          %p310 = pneg %p77
        $region46: #{tpu_custom_call.1} parent=39 // pred_check_branch
          %312 = sbr.rel (%p310) target = $region48
        $region47: #{tpu_custom_call.1} parent=39 // pred_region
          %314 = dma.done [#allocation8], 128
        $region48: #{tpu_custom_call.1} parent=39 // pred_fallthru
          _
        %s315 = sand.u32 %s23, 1
        %s316 = scalar_lea.sflag [#allocation5], %s315
        %s317 = sand.u32 %s90, 1
        %s318 = scalar_lea.vmem [#allocation9], %s317
        // Predicated region
        $region49: #{tpu_custom_call.1} parent=39 // pred_check
          %p319 = pneg %p103
        $region50: #{tpu_custom_call.1} parent=39 // pred_check_branch
          %321 = sbr.rel (%p319) target = $region52
        $region51: #{tpu_custom_call.1} parent=39 // pred_region
          %323 = dma.done %s316, 16
        $region52: #{tpu_custom_call.1} parent=39 // pred_fallthru
          _
        %s324 = sand.u32 %s23, 1
        %s325 = scalar_lea.sflag [#allocation5], %s324
        %s326 = sand.u32 %s116, 1
        %s327 = smul.addr %s326, 256
        %s328 = scalar_lea.vmem [#allocation10], %s327
        // Predicated region
        $region53: #{tpu_custom_call.1} parent=39 // pred_check
          %p329 = pneg %p129
        $region54: #{tpu_custom_call.1} parent=39 // pred_check_branch
          %331 = sbr.rel (%p329) target = $region56
        $region55: #{tpu_custom_call.1} parent=39 // pred_region
          %333 = dma.done %s325, 4096
        $region56: #{tpu_custom_call.1} parent=39 // pred_fallthru
          _
        %s334 = sand.u32 %s23, 1
        %s335 = scalar_lea.sflag [#allocation5], %s334
        %s336 = sand.u32 %s142, 1
        %s337 = smul.addr %s336, 256
        %s338 = scalar_lea.vmem [#allocation11], %s337
        // Predicated region
        $region57: #{tpu_custom_call.1} parent=39 // pred_check
          %p339 = pneg %p155
        $region58: #{tpu_custom_call.1} parent=39 // pred_check_branch
          %341 = sbr.rel (%p339) target = $region60
        $region59: #{tpu_custom_call.1} parent=39 // pred_region
          %343 = dma.done %s335, 4096
        $region60: #{tpu_custom_call.1} parent=39 // pred_fallthru
          _
        %s344 = sand.u32 %s23, 1
        %s345 = scalar_lea.sflag [#allocation5], %s344
        %s346 = sand.u32 %s43, 1
        %s347 = smul.addr %s346, 16
        %s348 = scalar_lea.vmem [#allocation4], %s347
        %p349 = pneg %p56
        %p350 = pneg %p53
        %p351 = pneg %p77
        %p352 = pneg %p74
        %s353 = sand.u32 %s23, 1
        %s354 = scalar_lea.sflag [#allocation5], %s353
        %s355 = sand.u32 %s90, 1
        %s356 = scalar_lea.vmem [#allocation9], %s355
        %p357 = pneg %p103
        %p358 = pneg %p100
        %s359 = sand.u32 %s23, 1
        %s360 = scalar_lea.sflag [#allocation5], %s359
        %s361 = sand.u32 %s116, 1
        %s362 = smul.addr %s361, 256
        %s363 = scalar_lea.vmem [#allocation10], %s362
        %p364 = pneg %p129
        %p365 = pneg %p126
        %s366 = sand.u32 %s23, 1
        %s367 = scalar_lea.sflag [#allocation5], %s366
        %s368 = sand.u32 %s142, 1
        %s369 = smul.addr %s368, 256
        %s370 = scalar_lea.vmem [#allocation11], %s369
        %p371 = pneg %p155
        %p372 = pneg %p152
        %p373 = pneg %p181
        %p374 = pneg %p178
        %s375 = sand.u32 %s168, 1
        %s376 = scalar_lea.sflag [#allocation6], %s375
        %s377 = sand.u32 %s168, 1
        %s378 = smul.addr %s377, 16
        %s379 = scalar_lea.vmem [#allocation12], %s378
        %s380 = smul.u32 16, %s28
        %p381 = scmp.eq.s32.totalorder %s28, 0
        // Predicated region
        $region61: #{tpu_custom_call.1} parent=39 // pred_check
          %p382 = pneg %p381
        $region62: #{tpu_custom_call.1} parent=39 // pred_check_branch
          %384 = sbr.rel (%p382) target = $region64
        $region63: #{tpu_custom_call.1} parent=39 // pred_region
          %v385 = vld [vmem:[%s304] sm:$0xff]
          %v386 = vld [vmem:[%s304 + $0x8] sm:$0xff]
          %v387 = vadd.f32 %v385, %v386
          %388 = vadd.xlane.f32.xlu0 %v387
          %v389 = vpop.xlane.xlu0 %388
          %v390 = vrcp.pop 256.0
          %v391 = vmul.f32 256.0, %v390
          %v392 = vsub.f32 1.0, %v391
          %v393 = vmul.f32 %v390, %v392
          %v394 = vadd.f32 %v390, %v393
          %vm395 = vweird.f32 %v390
          %v396 = vsel %vm395, %v390, %v394
          %v397 = vmul.f32 %v389, %v396
          %v398 = vsub.f32 %v385, %v397
          %v399 = vsub.f32 %v386, %v397
          %v400 = vmul.f32 %v398, %v398
          %v401 = vmul.f32 %v399, %v399
          %v402 = vadd.f32 %v400, %v401
          %403 = vadd.xlane.f32.xlu0 %v402
          %v404 = vpop.xlane.xlu0 %403
          %v405 = vmul.f32 %v404, %v396
          %v406 = vadd.f32 %v405, 1e-05
          %v407 = vrsqrt.pop %v406
          %v408 = vmul.f32 %v407, %v406
          %v409 = vmul.f32 %v408, %v407
          %v410 = vmul.f32 0.5, %v409
          %v411 = vsub.f32 1.5, %v410
          %v412 = vmul.f32 %v407, %v411
          %vm413 = vweird.f32 %v406
          %vm414 = vweird.f32 %v407
          %vm415 = vmor %vm413, %vm414
          %v416 = vsel %vm415, %v407, %v412
          %v417 = vmul.f32 %v398, %v416
          %v418 = vmul.f32 %v399, %v416
          %v419 = vld [vmem:[#allocation7] ss:$4 sm:$0x3]
          %v421 = vperm.slane %v419, 0
          %v422 = vperm.slane %v419, 1
          %v425 = vmul.f32 %v417, %v421
          %v426 = vmul.f32 %v418, %v422
          %s427 = scalar_lea.vmem [#allocation7], 1
          %v428 = vld [vmem:[%s427] ss:$4 sm:$0x3]
          %v430 = vperm.slane %v428, 0
          %v431 = vperm.slane %v428, 1
          %v434 = vadd.f32 %v425, %v430
          %v435 = vadd.f32 %v426, %v431
          %436 = vst [vmem:[#allocation2] sm:$0xff] %v434
          %437 = vst [vmem:[#allocation2 + $0x8] sm:$0xff] %v435
          %s438 = scalar_lea.vmem [#allocation7], 2
          %v439 = vld [vmem:[%s438] ss:$4 sm:$0x3]
          %v441 = vperm.slane %v439, 0
          %v442 = vperm.slane %v439, 1
          %v445 = vadd.f32 %v434, %v441
          %v446 = vadd.f32 %v435, %v442
          %447 = vst [vmem:[#allocation3] sm:$0xff] %v445
          %448 = vst [vmem:[#allocation3 + $0x8] sm:$0xff] %v446
        $region64: #{tpu_custom_call.1} parent=39 // pred_fallthru
          _
        %v449 = vld [vmem:[#allocation2] sm:$0xff]
        %v450 = vld [vmem:[#allocation2 + $0x8] sm:$0xff]
        %v451 = vld [vmem:[%s328] sm:$0xff]
        %v452 = vld [vmem:[%s328 + $0x8] sm:$0xff]
        %v453 = vld [vmem:[%s328 + $0x10] sm:$0xff]
        %v454 = vld [vmem:[%s328 + $0x18] sm:$0xff]
        %v455 = vld [vmem:[%s328 + $0x20] sm:$0xff]
        %v456 = vld [vmem:[%s328 + $0x28] sm:$0xff]
        %v457 = vld [vmem:[%s328 + $0x30] sm:$0xff]
        %v458 = vld [vmem:[%s328 + $0x38] sm:$0xff]
        %v459 = vld [vmem:[%s328 + $0x40] sm:$0xff]
        %v460 = vld [vmem:[%s328 + $0x48] sm:$0xff]
        %v461 = vld [vmem:[%s328 + $0x50] sm:$0xff]
        %v462 = vld [vmem:[%s328 + $0x58] sm:$0xff]
        %v463 = vld [vmem:[%s328 + $0x60] sm:$0xff]
        %v464 = vld [vmem:[%s328 + $0x68] sm:$0xff]
        %v465 = vld [vmem:[%s328 + $0x70] sm:$0xff]
        %v466 = vld [vmem:[%s328 + $0x78] sm:$0xff]
        %v467 = vld [vmem:[%s328 + $0x80] sm:$0xff]
        %v468 = vld [vmem:[%s328 + $0x88] sm:$0xff]
        %v469 = vld [vmem:[%s328 + $0x90] sm:$0xff]
        %v470 = vld [vmem:[%s328 + $0x98] sm:$0xff]
        %v471 = vld [vmem:[%s328 + $0xa0] sm:$0xff]
        %v472 = vld [vmem:[%s328 + $0xa8] sm:$0xff]
        %v473 = vld [vmem:[%s328 + $0xb0] sm:$0xff]
        %v474 = vld [vmem:[%s328 + $0xb8] sm:$0xff]
        %v475 = vld [vmem:[%s328 + $0xc0] sm:$0xff]
        %v476 = vld [vmem:[%s328 + $0xc8] sm:$0xff]
        %v477 = vld [vmem:[%s328 + $0xd0] sm:$0xff]
        %v478 = vld [vmem:[%s328 + $0xd8] sm:$0xff]
        %v479 = vld [vmem:[%s328 + $0xe0] sm:$0xff]
        %v480 = vld [vmem:[%s328 + $0xe8] sm:$0xff]
        %v481 = vld [vmem:[%s328 + $0xf0] sm:$0xff]
        %v482 = vld [vmem:[%s328 + $0xf8] sm:$0xff]
        %v483 = vld [vmem:[%s318] sm:$0x1]
        %v485 = vperm.slane %v483, 0
        %487 = vmatpush.msra.mxu0 %v466
        %488 = vmatpush.msra.mxu0 %v465
        %489 = vmatpush.msra.mxu0 %v464
        %490 = vmatpush.msra.mxu0 %v463
        %491 = vmatpush.msra.mxu0 %v462
        %492 = vmatpush.msra.mxu0 %v461
        %493 = vmatpush.msra.mxu0 %v460
        %494 = vmatpush.msra.mxu0 %v459
        %495 = vmatpush.msra.mxu0 %v458
        %496 = vmatpush.msra.mxu0 %v457
        %497 = vmatpush.msra.mxu0 %v456
        %498 = vmatpush.msra.mxu0 %v455
        %499 = vmatpush.msra.mxu0 %v454
        %500 = vmatpush.msra.mxu0 %v453
        %501 = vmatpush.msra.mxu0 %v452
        %502 = vmatpush.msra.mxu0 %v451
        %503 = vmatmul.f32.gmra.mxu0 %v449
        %v504 = vpop.f32.mrf.mxu0
        %v505 = vadd.f32 %v485, %v504
        %506 = vdwg.mxu0
        %507 = vmatpush.msra.mxu0 %v482
        %508 = vmatpush.msra.mxu0 %v481
        %509 = vmatpush.msra.mxu0 %v480
        %510 = vmatpush.msra.mxu0 %v479
        %511 = vmatpush.msra.mxu0 %v478
        %512 = vmatpush.msra.mxu0 %v477
        %513 = vmatpush.msra.mxu0 %v476
        %514 = vmatpush.msra.mxu0 %v475
        %515 = vmatpush.msra.mxu0 %v474
        %516 = vmatpush.msra.mxu0 %v473
        %517 = vmatpush.msra.mxu0 %v472
        %518 = vmatpush.msra.mxu0 %v471
        %519 = vmatpush.msra.mxu0 %v470
        %520 = vmatpush.msra.mxu0 %v469
        %521 = vmatpush.msra.mxu0 %v468
        %522 = vmatpush.msra.mxu0 %v467
        %523 = vmatmul.f32.gmra.mxu0 %v450
        %v524 = vpop.f32.mrf.mxu0
        %v525 = vadd.f32 %v505, %v524
        %526 = vdwg.mxu0
        %v527 = vmul.f32 %v525, 0.5
        %v528 = vmul.f32 %v525, 0.70710677
        %v529 = vmul.f32 %v528, %v528
        %v530 = vmin.f32 16.0, %v529
        %v531 = vmul.f32 %v530, 2.1237322e-06
        %v532 = vadd.f32 %v531, 0.00028619796
        %v533 = vmul.f32 %v530, %v532
        %v534 = vadd.f32 %v533, 0.0036580483
        %v535 = vmul.f32 %v530, %v534
        %v536 = vadd.f32 %v535, 0.05243302
        %v537 = vmul.f32 %v530, %v536
        %v538 = vadd.f32 %v537, 0.18741608
        %v539 = vmul.f32 %v530, %v538
        %v540 = vadd.f32 %v539, 1.1283791
        %v541 = vmul.f32 %v528, %v540
        %v542 = vmul.f32 %v530, 3.8918573e-05
        %v543 = vadd.f32 %v542, 0.001143296
        %v544 = vmul.f32 %v530, %v543
        %v545 = vadd.f32 %v544, 0.014752088
        %v546 = vmul.f32 %v530, %v545
        %v547 = vadd.f32 %v546, 0.112945676
        %v548 = vmul.f32 %v530, %v547
        %v549 = vadd.f32 %v548, 0.4994258
        %v550 = vmul.f32 %v530, %v549
        %v551 = vadd.f32 %v550, 1.0
        %v552 = vrcp.pop %v551
        %v553 = vmul.f32 %v551, %v552
        %v554 = vsub.f32 1.0, %v553
        %v555 = vmul.f32 %v552, %v554
        %v556 = vadd.f32 %v552, %v555
        %vm557 = vweird.f32 %v551
        %vm558 = vweird.f32 %v552
        %vm559 = vmor %vm557, %vm558
        %v560 = vsel %vm559, %v552, %v556
        %v561 = vand.u32 2147483647, %v551
        %vm562 = vcmp.eq.f32.partialorder %v561, 8.507059e+37
        %v563 = vand.u32 %v551, 2147483648
        %v564 = vor.u32 1.1754944e-38, %v563
        %v565 = vsel %vm562, %v564, %v560
        %v566 = vmul.f32 %v541, %v565
        %v567 = vmin.f32 %v566, 1.0
        %v568 = vmax.f32 %v567, -1.0
        %v569 = vadd.f32 %v568, 1.0
        %v570 = vmul.f32 %v527, %v569
        %v571 = vld [vmem:[#allocation3] sm:$0xff]
        %v572 = vld [vmem:[#allocation3 + $0x8] sm:$0xff]
        %v573 = vld [vmem:[%s338] sm:$0xff]
        %v574 = vld [vmem:[%s338 + $0x8] sm:$0xff]
        %v575 = vld [vmem:[%s338 + $0x10] sm:$0xff]
        %v576 = vld [vmem:[%s338 + $0x18] sm:$0xff]
        %v577 = vld [vmem:[%s338 + $0x20] sm:$0xff]
        %v578 = vld [vmem:[%s338 + $0x28] sm:$0xff]
        %v579 = vld [vmem:[%s338 + $0x30] sm:$0xff]
        %v580 = vld [vmem:[%s338 + $0x38] sm:$0xff]
        %v581 = vld [vmem:[%s338 + $0x40] sm:$0xff]
        %v582 = vld [vmem:[%s338 + $0x48] sm:$0xff]
        %v583 = vld [vmem:[%s338 + $0x50] sm:$0xff]
        %v584 = vld [vmem:[%s338 + $0x58] sm:$0xff]
        %v585 = vld [vmem:[%s338 + $0x60] sm:$0xff]
        %v586 = vld [vmem:[%s338 + $0x68] sm:$0xff]
        %v587 = vld [vmem:[%s338 + $0x70] sm:$0xff]
        %v588 = vld [vmem:[%s338 + $0x78] sm:$0xff]
        %v589 = vld [vmem:[%s338 + $0x80] sm:$0xff]
        %v590 = vld [vmem:[%s338 + $0x88] sm:$0xff]
        %v591 = vld [vmem:[%s338 + $0x90] sm:$0xff]
        %v592 = vld [vmem:[%s338 + $0x98] sm:$0xff]
        %v593 = vld [vmem:[%s338 + $0xa0] sm:$0xff]
        %v594 = vld [vmem:[%s338 + $0xa8] sm:$0xff]
        %v595 = vld [vmem:[%s338 + $0xb0] sm:$0xff]
        %v596 = vld [vmem:[%s338 + $0xb8] sm:$0xff]
        %v597 = vld [vmem:[%s338 + $0xc0] sm:$0xff]
        %v598 = vld [vmem:[%s338 + $0xc8] sm:$0xff]
        %v599 = vld [vmem:[%s338 + $0xd0] sm:$0xff]
        %v600 = vld [vmem:[%s338 + $0xd8] sm:$0xff]
        %v601 = vld [vmem:[%s338 + $0xe0] sm:$0xff]
        %v602 = vld [vmem:[%s338 + $0xe8] sm:$0xff]
        %v603 = vld [vmem:[%s338 + $0xf0] sm:$0xff]
        %v604 = vld [vmem:[%s338 + $0xf8] sm:$0xff]
        %605 = vmatpush.msra.mxu0 %v603
        %606 = vmatpush.msra.mxu0 %v601
        %607 = vmatpush.msra.mxu0 %v599
        %608 = vmatpush.msra.mxu0 %v597
        %609 = vmatpush.msra.mxu0 %v595
        %610 = vmatpush.msra.mxu0 %v593
        %611 = vmatpush.msra.mxu0 %v591
        %612 = vmatpush.msra.mxu0 %v589
        %613 = vmatpush.msra.mxu0 %v587
        %614 = vmatpush.msra.mxu0 %v585
        %615 = vmatpush.msra.mxu0 %v583
        %616 = vmatpush.msra.mxu0 %v581
        %617 = vmatpush.msra.mxu0 %v579
        %618 = vmatpush.msra.mxu0 %v577
        %619 = vmatpush.msra.mxu0 %v575
        %620 = vmatpush.msra.mxu0 %v573
        %621 = vmatmul.f32.gmra.mxu0 %v570
        %v622 = vpop.f32.mrf.mxu0
        %v623 = vadd.f32 0.0, %v622
        %624 = vdwg.mxu0
        %625 = vmatpush.msra.mxu0 %v604
        %626 = vmatpush.msra.mxu0 %v602
        %627 = vmatpush.msra.mxu0 %v600
        %628 = vmatpush.msra.mxu0 %v598
        %629 = vmatpush.msra.mxu0 %v596
        %630 = vmatpush.msra.mxu0 %v594
        %631 = vmatpush.msra.mxu0 %v592
        %632 = vmatpush.msra.mxu0 %v590
        %633 = vmatpush.msra.mxu0 %v588
        %634 = vmatpush.msra.mxu0 %v586
        %635 = vmatpush.msra.mxu0 %v584
        %636 = vmatpush.msra.mxu0 %v582
        %637 = vmatpush.msra.mxu0 %v580
        %638 = vmatpush.msra.mxu0 %v578
        %639 = vmatpush.msra.mxu0 %v576
        %640 = vmatpush.msra.mxu0 %v574
        %641 = vmatmul.f32.gmra.mxu0 %v570
        %v642 = vpop.f32.mrf.mxu0
        %v643 = vadd.f32 0.0, %v642
        %644 = vdwg.mxu0
        %v645 = vadd.f32 %v571, %v623
        %v646 = vadd.f32 %v572, %v643
        %647 = vst [vmem:[#allocation3] sm:$0xff] %v645
        %648 = vst [vmem:[#allocation3 + $0x8] sm:$0xff] %v646
        %p649 = scmp.eq.s32.totalorder %s28, 1
        // Predicated region
        $region65: #{tpu_custom_call.1} parent=39 // pred_check
          %p650 = pneg %p649
        $region66: #{tpu_custom_call.1} parent=39 // pred_check_branch
          %652 = sbr.rel (%p650) target = $region68
        $region67: #{tpu_custom_call.1} parent=39 // pred_region
          %v653 = vld [vmem:[#allocation3] sm:$0xff]
          %v654 = vld [vmem:[#allocation3 + $0x8] sm:$0xff]
          %655 = vst [vmem:[%s379] sm:$0xff] %v653
          %656 = vst [vmem:[%s379 + $0x8] sm:$0xff] %v654
        $region68: #{tpu_custom_call.1} parent=39 // pred_fallthru
          _
        %s657 = sand.u32 %s168, 1
        %s658 = scalar_lea.sflag [#allocation6], %s657
        %s659 = sand.u32 %s168, 1
        %s660 = smul.addr %s659, 16
        %s661 = scalar_lea.vmem [#allocation12], %s660
        // Predicated region
        $region69: #{tpu_custom_call.1} parent=39 // pred_check
          %p662 = pneg %p178
        $region70: #{tpu_custom_call.1} parent=39 // pred_check_branch
          %664 = sbr.rel (%p662) target = $region72
        $region71: #{tpu_custom_call.1} parent=39 // pred_region
          %666 = vsyncadd %s658, 0
          %s667 = smul.addr %s27, 2
          %s668 = smul.addr %s667, 8
          %s669 = scalar_lea.hbm %s5, %s668
          %s671 = sshll.u32 %s661, 4
          %s672 = int_to_ptr.vmem [resolvable:$true] %s671
          %s673 = sshll.u32 %s669, 4
          %s674 = int_to_ptr.hbm [resolvable:$true] %s673
          %676 = dma.vmem_to_hbm [thread:$0]  %s672, 256, %s674, %s658
        $region72: #{tpu_custom_call.1} parent=39 // pred_fallthru
          _
      $region40: #{tpu_custom_call.1} parent=5 // pred_fallthru
        _
      %p677 = scmp.le.s32.totalorder 2, %s18
      // Predicated region
      $region73: #{tpu_custom_call.1} parent=5 // pred_check
        %p678 = pneg %p677
      $region74: #{tpu_custom_call.1} parent=5 // pred_check_branch
        %680 = sbr.rel (%p678) target = $region76
      $region75: #{tpu_custom_call.1} parent=5 // pred_region
        %s681 = ssub.s32 %s18, 2
        // Predicated region
        $region77: #{tpu_custom_call.1} parent=75 // pred_check
          %p682 = pneg %p184
        $region78: #{tpu_custom_call.1} parent=75 // pred_check_branch
          %684 = sbr.rel (%p682) target = $region80
        $region79: #{tpu_custom_call.1} parent=75 // pred_region
          %s685 = sand.u32 %s169, 1
          %s686 = scalar_lea.sflag [#allocation6], %s685
          %s687 = sand.u32 %s169, 1
          %s688 = smul.addr %s687, 16
          %s689 = scalar_lea.vmem [#allocation12], %s688
          %691 = dma.done %s686, 256
        $region80: #{tpu_custom_call.1} parent=75 // pred_fallthru
          _
      $region76: #{tpu_custom_call.1} parent=5 // pred_fallthru
        _
    $region6: #{tpu_custom_call.1} parent=1 // loop_footer
      %s22 = sadd.s32 1, %s18
    $region7: #{tpu_custom_call.1} parent=1 // loop_footer_branch
      %17 = sbr.rel target = $region3
    $region8: #{tpu_custom_call.1} parent=1 // loop_exit
      _
    %692 = vsyncpa [#allocation5], 1
    %s693 = scalar_lea.sflag [#allocation5], 1
    %694 = vsyncpa %s693, 1
    %695 = vsyncpa [#allocation8], 1
    %696 = vsyncpa [#allocation6], 1
    %s697 = scalar_lea.sflag [#allocation6], 1
    %698 = vsyncpa %s697, 1

</llo_original>
